<compile_context>
chip_gen: v7x
topology: tpu7x:2x2x1
jax: 0.10.0
libtpu: 0.0.40
codegen_flags: <defaults>
</compile_context>

<pallas_src>
import jax
import jax.numpy as jnp
from jax.experimental import pallas as pl
from jax.experimental.pallas import tpu as pltpu

_LANE = 128                    # vreg lane width
_SUBLANE = 8                   # f32 sublane tiling
_TARGET_TILE_BYTES = 2 * 1024 * 1024   # ~2 MiB per x/out block (fits v5e/v6e/v7x VMEM w/ 2x buffering)


def _bias_relu_kernel(x_ref, b_ref, o_ref):
    # x_ref: (tile_m, lanes); b_ref: (1, lanes) broadcast over rows (VPU add + max).
    o_ref[...] = jnp.maximum(x_ref[...] + b_ref[...], 0.0).astype(o_ref.dtype)


def b1_relu(x, bias):
    """relu(x + bias); x: (B, S, H), bias: (1, 1, H)."""
    B, S, H = x.shape
    total = B * S * H
    bias_vec = bias.reshape(-1).astype(x.dtype)

    # Repack to a lane-dense 2-D slab so every store is a full-width vst.
    if H % _LANE == 0:
        lanes = H
        x2 = x.reshape(-1, lanes)
        bias_row = bias_vec.reshape(1, lanes)
    elif H < _LANE and (_LANE % H == 0) and (total % _LANE == 0):
        # e.g. H=32: pack 128/H bias copies side-by-side so each 128-lane row
        # of the flattened x lines up with the tiled bias.
        lanes = _LANE
        x2 = x.reshape(-1, lanes)
        bias_row = jnp.tile(bias_vec, _LANE // H).reshape(1, lanes)
    else:
        # Fallback: keep H as the (full-extent) last dim; stores may be masked.
        lanes = H
        x2 = x.reshape(-1, lanes)
        bias_row = bias_vec.reshape(1, lanes)

    rows = x2.shape[0]

    # ~2 MiB row tiles (multiple of 8 sublanes), independent of B/S/H, so the
    # grid is deep enough to pipeline DMA and shard across TCs on v7x.
    bytes_per_row = lanes * x2.dtype.itemsize
    tile_m = max(_SUBLANE, _TARGET_TILE_BYTES // bytes_per_row)
    tile_m = (tile_m // _SUBLANE) * _SUBLANE
    if tile_m >= rows:
        tile_m = rows          # single full-extent block (always a legal shape)
    grid = (pl.cdiv(rows, tile_m),)

    out2 = pl.pallas_call(
        _bias_relu_kernel,
        out_shape=jax.ShapeDtypeStruct((rows, lanes), x.dtype),
        grid_spec=pltpu.PrefetchScalarGridSpec(
            num_scalar_prefetch=0,
            grid=grid,
            in_specs=[
                pl.BlockSpec((tile_m, lanes), lambda i: (i, 0)),
                pl.BlockSpec((1, lanes), lambda i: (0, 0)),  # bias: constant index -> DMA'd once, stays resident
            ],
            out_specs=pl.BlockSpec((tile_m, lanes), lambda i: (i, 0)),
        ),
        compiler_params=pltpu.CompilerParams(
            dimension_semantics=("parallel",),
            vmem_limit_bytes=64 * 1024 * 1024,
        ),
    )(x2, bias_row)

    return out2.reshape(B, S, H)


if __name__ == "__main__":
    key = jax.random.PRNGKey(0)
    B, S, H = 2, 8, 32  # bias_shape = 32

    x = jax.random.normal(key, (B, S, H), dtype=jnp.float32)
    # nn.init.zeros_ — deterministic zero init, shape (1, 1, bias_shape)
    bias = jnp.zeros((1, 1, H), dtype=jnp.float32)

    out = jax.block_until_ready(b1_relu(x, bias))

    # sanity check against plain-JAX reference
    ref = jnp.maximum(x + bias, 0.0)
    assert out.shape == (B, S, H)
    assert jnp.allclose(out, ref, atol=1e-6), "mismatch vs reference"

    print("KERNEL_OK")
</pallas_src>

<mosaic_0001>
module attributes {stable_mosaic.version = 11 : i64} {
  func.func @_bias_relu_kernel(%arg0: i32, %arg1: memref<4x128xf32, #tpu.memory_space<vmem>>, %arg2: memref<1x128xf32, #tpu.memory_space<vmem>>, %arg3: memref<4x128xf32, #tpu.memory_space<vmem>>) attributes {dimension_semantics = [#tpu.dimension_semantics<parallel>], iteration_bounds = array<i64: 1>, scalar_prefetch = 0 : i64, scratch_operands = 0 : i64, tpu.core_type = #tpu.core_type<tc>, window_params = [{transform_indices = @transform_0, window_bounds = array<i64: 4, 128>}, {pipeline_mode = #tpu.pipeline_mode<synchronous>, transform_indices = @transform_1, window_bounds = array<i64: 1, 128>}, {transform_indices = @transform_2, window_bounds = array<i64: 4, 128>}]} {
    %c0 = arith.constant 0 : index
    %c0_0 = arith.constant 0 : index
    %0 = vector.load %arg1[%c0, %c0_0] : memref<4x128xf32, #tpu.memory_space<vmem>>, vector<4x128xf32>
    %c0_1 = arith.constant 0 : index
    %c0_2 = arith.constant 0 : index
    %1 = vector.load %arg2[%c0_1, %c0_2] : memref<1x128xf32, #tpu.memory_space<vmem>>, vector<1x128xf32>
    %2 = vector.broadcast %1 : vector<1x128xf32> to vector<4x128xf32>
    %3 = arith.addf %0, %2 : vector<4x128xf32>
    %cst = arith.constant 0.000000e+00 : f32
    %4 = vector.broadcast %cst : f32 to vector<4x128xf32>
    %5 = arith.maximumf %3, %4 : vector<4x128xf32>
    %c0_3 = arith.constant 0 : index
    %c0_4 = arith.constant 0 : index
    %6 = vector.load %arg3[%c0_3, %c0_4] : memref<4x128xf32, #tpu.memory_space<vmem>>, vector<4x128xf32>
    tpu.vector_store %arg3[%c0_3, %c0_4], %5 {strides = array<i32>} : memref<4x128xf32, #tpu.memory_space<vmem>>, vector<4x128xf32>,
    return
  }
  func.func @transform_0(%arg0: i32) -> (i32, i32) {
    %c0_i32 = arith.constant 0 : i32
    %c0_i32_0 = arith.constant 0 : i32
    return %arg0, %c0_i32 : i32, i32
  }
  func.func @transform_1(%arg0: i32) -> (i32, i32) {
    %c0_i32 = arith.constant 0 : i32
    %c0_i32_0 = arith.constant 0 : i32
    %c0_i32_1 = arith.constant 0 : i32
    return %c0_i32, %c0_i32_0 : i32, i32
  }
  func.func @transform_2(%arg0: i32) -> (i32, i32) {
    %c0_i32 = arith.constant 0 : i32
    %c0_i32_0 = arith.constant 0 : i32
    return %arg0, %c0_i32 : i32, i32
  }
}

</mosaic_0001>

<llo_original>
// kernel: tpu_custom_call.1
$region0: #{tpu_custom_call.1}
  #allocation0 [shape = 'u32[]', space=smem, size = 0x4, offset = 0x4, fixed_abs, tag = 'smem constant byte address 0x4 - core index']
  #allocation1 [shape = 'u32[144,128]{1,0:T(1,128)}', space=vmem, size = 0x12000, scoped, tag = 'internal scratch']
  %s0 = inlined_call_operand.hbm [shape: f32[4,128], index: 0, kind: input, shape index: {}]
  %s1 = inlined_call_operand.hbm [shape: f32[1,128], index: 1, kind: input, shape index: {}]
  %s2 = inlined_call_operand.hbm [shape: f32[4,128], index: 2, kind: output, shape index: {}]
  %s3 = sld [smem:[#allocation0]]
  $region26: #{tpu_custom_call.1} parent=0
    _
  %s5 = ssub.s32 1, %s3
  %s6 = scalar_select 0, %s5, %s3
  $region1: #{tpu_custom_call.1} parent=0
    #allocation2 [shape = 'u8[2048]{0}', space=vmem, size = 0x800, scoped, tag = 'input window, operand 0, single buffered']
    #allocation3 [shape = 's32[1]{0}', space=sflag, size = 0x4, scoped, tag = 'scoped memory for tpu_custom_call.1']
    #allocation4 [shape = 's32[1]{0}', space=sflag, size = 0x4, scoped, tag = 'scoped memory for tpu_custom_call.1']
    #allocation5 [shape = 'u8[512]{0}', space=vmem, size = 0x400, scoped, tag = 'input window, operand 1, single buffered']
    #allocation6 [shape = 's32[1]{0}', space=sflag, size = 0x4, scoped, tag = 'scoped memory for tpu_custom_call.1']
    #allocation7 [shape = 'u8[2048]{0}', space=vmem, size = 0x800, scoped, tag = 'output window, operand 0, single buffered']
    %7 = vsyncpa [#allocation3], 0
    %8 = vsyncpa [#allocation6], 0
    %9 = vsyncpa [#allocation4], 0
    // Predicated region
    $region2: #{tpu_custom_call.1} parent=1 // pred_check
      _
    $region3: #{tpu_custom_call.1} parent=1 // pred_check_branch
      %11 = sbr.rel (0) target = $region5
    $region4: #{tpu_custom_call.1} parent=1 // pred_region
      %s13 = ssub.s32 64, 64
      %14 = vsyncadd [#allocation3], %s13
      %s16 = sshll.u32 [#allocation2], 4
      %s17 = int_to_ptr.vmem [resolvable:$true] %s16
      %19 = dma.hbm_to_vmem [thread:$0]  %s0, 64, %s17, [#allocation3]
    $region5: #{tpu_custom_call.1} parent=1 // pred_fallthru
      _
    // Predicated region
    $region6: #{tpu_custom_call.1} parent=1 // pred_check
      _
    $region7: #{tpu_custom_call.1} parent=1 // pred_check_branch
      %21 = sbr.rel (0) target = $region9
    $region8: #{tpu_custom_call.1} parent=1 // pred_region
      %s23 = ssub.s32 16, 16
      %24 = vsyncadd [#allocation6], %s23
      %s26 = sshll.u32 [#allocation5], 4
      %s27 = int_to_ptr.vmem [resolvable:$true] %s26
      %29 = dma.hbm_to_vmem [thread:$0]  %s1, 16, %s27, [#allocation6]
    $region9: #{tpu_custom_call.1} parent=1 // pred_fallthru
      _
    // Predicated region
    $region10: #{tpu_custom_call.1} parent=1 // pred_check
      _
    $region11: #{tpu_custom_call.1} parent=1 // pred_check_branch
      %31 = sbr.rel (0) target = $region13
    $region12: #{tpu_custom_call.1} parent=1 // pred_region
      %32 = dma.done [#allocation3], 64
    $region13: #{tpu_custom_call.1} parent=1 // pred_fallthru
      _
    // Predicated region
    $region14: #{tpu_custom_call.1} parent=1 // pred_check
      _
    $region15: #{tpu_custom_call.1} parent=1 // pred_check_branch
      %34 = sbr.rel (0) target = $region17
    $region16: #{tpu_custom_call.1} parent=1 // pred_region
      %35 = dma.done [#allocation6], 16
    $region17: #{tpu_custom_call.1} parent=1 // pred_fallthru
      _
    %v36 = vld [vmem:[#allocation2] sm:$0xf]
    %v37 = vld [vmem:[#allocation5] sm:$0x1]
    %v39 = vlaneseq
    %v40 = vshrl.u32 %v39, 7
    %v41 = vsub.s32 0, %v40
    %v42 = vrot.slane %v37, %v41
    %v44 = vadd.f32 %v36, %v42
    %v45 = vmax.f32 %v44, 0.0
    %46 = vst [vmem:[#allocation7] sm:$0xf] %v45
    // Predicated region
    $region18: #{tpu_custom_call.1} parent=1 // pred_check
      _
    $region19: #{tpu_custom_call.1} parent=1 // pred_check_branch
      %48 = sbr.rel (0) target = $region21
    $region20: #{tpu_custom_call.1} parent=1 // pred_region
      %s50 = ssub.s32 64, 64
      %51 = vsyncadd [#allocation4], %s50
      %s53 = sshll.u32 [#allocation7], 4
      %s54 = int_to_ptr.vmem [resolvable:$true] %s53
      %56 = dma.vmem_to_hbm [thread:$0]  %s54, 64, %s2, [#allocation4]
    $region21: #{tpu_custom_call.1} parent=1 // pred_fallthru
      _
    // Predicated region
    $region22: #{tpu_custom_call.1} parent=1 // pred_check
      _
    $region23: #{tpu_custom_call.1} parent=1 // pred_check_branch
      %58 = sbr.rel (0) target = $region25
    $region24: #{tpu_custom_call.1} parent=1 // pred_region
      %59 = dma.done [#allocation4], 64
    $region25: #{tpu_custom_call.1} parent=1 // pred_fallthru
      _
    %60 = vsyncpa [#allocation3], 1
    %61 = vsyncpa [#allocation6], 1
    %62 = vsyncpa [#allocation4], 1

</llo_original>
